<compile_context>
chip_gen: v7x
topology: tpu7x:2x2x1
jax: 0.10.0
libtpu: 0.0.40
codegen_flags: <defaults>
</compile_context>

<pallas_src>
import functools

import jax
import jax.numpy as jnp
from jax.experimental import pallas as pl
from jax.experimental.pallas import tpu as pltpu


# Hard-coded CE class weights from the PyTorch module (implies num_classes == 3).
CE_WEIGHTS = (1.0 / 1223, 1.0 / 2444, 1.0 / 1687)
IGNORE_INDEX = -100


def _round_up(x, m):
    return (x + m - 1) // m * m


def _elr_kernel(logits_ref, target_ref, weight_ref,
                prednorm_ref, num_ref, den_ref, *, num_classes):
    """One grid step processes a (CP, BB) column block (classes x batch).

    logits_ref   : (CP, BB) f32 VMEM   raw logits, transposed; class axis padded to CP
    target_ref   : (1, BB)  i32 VMEM   class id, or -100 (ignore / batch padding)
    weight_ref   : (CP, 1)  f32 VMEM   CE class weights (zero on padded sublanes)
    prednorm_ref : (CP, BB) f32 VMEM   clamp(softmax)/col-sum (EMA input), transposed
    num_ref      : (1, BB)  f32 VMEM   weight[t] * nll[t]  (0 if ignored/padded)
    den_ref      : (1, BB)  f32 VMEM   weight[t]           (0 if ignored/padded)
    """
    x = logits_ref[...].astype(jnp.float32)              # (CP, BB)
    tgt = target_ref[...]                                # (1, BB)
    w = weight_ref[...].astype(jnp.float32)              # (CP, 1)

    cp, bb = x.shape
    cls = jax.lax.broadcasted_iota(jnp.int32, (cp, bb), 0)   # sublane = class id
    class_mask = cls < num_classes

    # ---- numerically stable log-softmax / softmax over the real classes ----
    neg_big = jnp.float32(-1e30)
    xm = jnp.where(class_mask, x, neg_big)
    col_max = jnp.max(xm, axis=0, keepdims=True)          # (1, BB)
    shifted = xm - col_max
    e = jnp.where(class_mask, jnp.exp(shifted), 0.0)
    s = jnp.sum(e, axis=0, keepdims=True)                 # (1, BB)
    inv_s = pl.reciprocal(s)                              # one divide per column
    log_p = shifted - jnp.log(s)                          # valid on real class rows

    # ---- clamp(softmax), renormalized (feeds the pred_hist EMA) ------------
    p = e * inv_s
    p = jnp.clip(p, 1e-4, 1.0 - 1e-4)
    p = jnp.where(class_mask, p, 0.0)
    p_sum = jnp.sum(p, axis=0, keepdims=True)
    prednorm_ref[...] = p * pl.reciprocal(p_sum)

    # ---- weighted cross-entropy partial terms (ignore_index = -100) --------
    valid = tgt != IGNORE_INDEX                           # (1, BB)
    tgt_safe = jnp.where(valid, tgt, 0)
    onehot = (cls == tgt_safe) & class_mask               # (CP, BB)
    nll = -jnp.sum(jnp.where(onehot, log_p, 0.0), axis=0, keepdims=True)
    w_col = jnp.sum(jnp.where(onehot, w, 0.0), axis=0, keepdims=True)
    validf = valid.astype(jnp.float32)
    num_ref[...] = w_col * nll * validf
    den_ref[...] = w_col * validf


def _elr_pallas(output, target, weight, *, batch_block=None):
    """Runs the Pallas kernel; returns (pred_norm[B, C], num[B], den[B])."""
    B, C = output.shape
    CP = _round_up(max(C, 1), 8)                          # sublane-dense class axis

    if batch_block is None:
        bb = min(32768, _round_up(B, 128))                # lane-dense batch block
    else:
        assert batch_block % 128 == 0
        bb = batch_block
    BP = _round_up(B, bb)
    grid = (BP // bb,)

    # Transposed, padded operands: classes on sublanes, batch on lanes.
    logits_p = jnp.pad(output.astype(jnp.float32).T, ((0, CP - C), (0, BP - B)))
    target_p = jnp.pad(target.astype(jnp.int32).reshape(1, B), ((0, 0), (0, BP - B)),
                       constant_values=IGNORE_INDEX)
    weight_p = jnp.pad(weight.astype(jnp.float32).reshape(C, 1), ((0, CP - C), (0, 0)))

    # Double-buffered working set (logits in + pred_norm out dominate).
    block_bytes = 2 * (bb * 4 * (2 * CP + 3) + CP * 4)
    vmem_limit = int(min(32 * 1024 * 1024,
                         max(16 * 1024 * 1024, block_bytes + (4 << 20))))

    pred_norm_t, num, den = pl.pallas_call(
        functools.partial(_elr_kernel, num_classes=C),
        out_shape=(
            jax.ShapeDtypeStruct((CP, BP), jnp.float32),
            jax.ShapeDtypeStruct((1, BP), jnp.float32),
            jax.ShapeDtypeStruct((1, BP), jnp.float32),
        ),
        grid_spec=pltpu.PrefetchScalarGridSpec(
            num_scalar_prefetch=0,
            grid=grid,
            in_specs=[
                pl.BlockSpec((CP, bb), lambda i: (0, i)),
                pl.BlockSpec((1, bb), lambda i: (0, i)),
                pl.BlockSpec((CP, 1), lambda i: (0, 0)),
            ],
            out_specs=(
                pl.BlockSpec((CP, bb), lambda i: (0, i)),
                pl.BlockSpec((1, bb), lambda i: (0, i)),
                pl.BlockSpec((1, bb), lambda i: (0, i)),
            ),
        ),
        compiler_params=pltpu.CompilerParams(
            dimension_semantics=("parallel",),
            vmem_limit_bytes=vmem_limit,
        ),
    )(logits_p, target_p, weight_p)

    return pred_norm_t[:C, :B].T, num[0, :B], den[0, :B]


def elr_loss_forward(index, output, target, pred_hist, *, alpha=0.3):
    """Functional equivalent of elr_loss.forward.

    Returns (final_loss, new_pred_hist).  new_pred_hist is the updated buffer
    (PyTorch mutates self.pred_hist in place; self.q == new_pred_hist[index]).
    """
    C = output.shape[1]
    weight = jnp.asarray(CE_WEIGHTS, dtype=jnp.float32)[:C]

    pred_norm, num, den = _elr_pallas(output, target, weight)

    ce_loss = jnp.sum(num) / jnp.sum(den)                 # weighted mean over valid rows

    # TODO(synk): the pred_hist gather + scatter uses dynamic (possibly duplicate)
    # indices; kept as jnp indexing / .at[].set in the wrapper (no clean tiled
    # Pallas equivalent for a duplicate-index scatter).
    new_rows = (1.0 - alpha) * pred_hist[index] + alpha * pred_norm
    new_pred_hist = pred_hist.at[index].set(new_rows)
    return ce_loss, new_pred_hist


def _reference(index, output, target, pred_hist, weight, alpha):
    """Pure-JAX reference mirroring the PyTorch module."""
    y_pred = jax.nn.softmax(output, axis=1)
    y_pred = jnp.clip(y_pred, 1e-4, 1.0 - 1e-4)
    new_rows = (1.0 - alpha) * pred_hist[index] + alpha * (
        y_pred / jnp.sum(y_pred, axis=1, keepdims=True))
    new_pred_hist = pred_hist.at[index].set(new_rows)

    log_p = jax.nn.log_softmax(output, axis=1)
    valid = target != IGNORE_INDEX
    t_safe = jnp.where(valid, target, 0)
    nll = -jnp.take_along_axis(log_p, t_safe[:, None], axis=1)[:, 0]
    w = weight[t_safe] * valid.astype(jnp.float32)
    ce = jnp.sum(w * nll) / jnp.sum(w)
    return ce, new_pred_hist


if __name__ == "__main__":
    key = jax.random.PRNGKey(0)
    k1, k2, k3 = jax.random.split(key, 3)

    num_examp, num_classes = 32, 3      # module's weight vector has 3 entries
    B = 16
    alpha = 0.3

    output = jax.random.normal(k1, (B, num_classes), dtype=jnp.float32)
    target = jax.random.randint(k2, (B,), 0, num_classes, dtype=jnp.int32)
    target = target.at[3].set(IGNORE_INDEX)              # exercise ignore_index=-100
    index = jax.random.permutation(k3, num_examp)[:B].astype(jnp.int32)
    pred_hist = jnp.zeros((num_examp, num_classes), dtype=jnp.float32)

    loss, new_hist = elr_loss_forward(index, output, target, pred_hist, alpha=alpha)
    loss = jax.block_until_ready(loss)
    new_hist = jax.block_until_ready(new_hist)

    weight = jnp.asarray(CE_WEIGHTS, dtype=jnp.float32)
    ref_loss, ref_hist = _reference(index, output, target, pred_hist, weight, alpha)
    assert jnp.allclose(loss, ref_loss, rtol=1e-4, atol=1e-5), (loss, ref_loss)
    assert jnp.allclose(new_hist, ref_hist, rtol=1e-4, atol=1e-5)

    print("KERNEL_OK")
</pallas_src>

<mosaic_0001>
module attributes {stable_mosaic.version = 11 : i64} {
  func.func @_elr_kernel(%arg0: i32, %arg1: memref<8x128xf32, #tpu.memory_space<vmem>>, %arg2: memref<1x128xi32, #tpu.memory_space<vmem>>, %arg3: memref<8x1xf32, #tpu.memory_space<vmem>>, %arg4: memref<8x128xf32, #tpu.memory_space<vmem>>, %arg5: memref<1x128xf32, #tpu.memory_space<vmem>>, %arg6: memref<1x128xf32, #tpu.memory_space<vmem>>) attributes {dimension_semantics = [#tpu.dimension_semantics<parallel>], iteration_bounds = array<i64: 1>, scalar_prefetch = 0 : i64, scratch_operands = 0 : i64, tpu.core_type = #tpu.core_type<tc>, window_params = [{transform_indices = @transform_0, window_bounds = array<i64: 8, 128>}, {transform_indices = @transform_1, window_bounds = array<i64: 1, 128>}, {pipeline_mode = #tpu.pipeline_mode<synchronous>, transform_indices = @transform_2, window_bounds = array<i64: 8, 1>}, {transform_indices = @transform_3, window_bounds = array<i64: 8, 128>}, {transform_indices = @transform_4, window_bounds = array<i64: 1, 128>}, {transform_indices = @transform_5, window_bounds = array<i64: 1, 128>}]} {
    %c0 = arith.constant 0 : index
    %c0_0 = arith.constant 0 : index
    %0 = vector.load %arg1[%c0, %c0_0] : memref<8x128xf32, #tpu.memory_space<vmem>>, vector<8x128xf32>
    %c0_1 = arith.constant 0 : index
    %c0_2 = arith.constant 0 : index
    %1 = vector.load %arg2[%c0_1, %c0_2] : memref<1x128xi32, #tpu.memory_space<vmem>>, vector<1x128xi32>
    %c0_3 = arith.constant 0 : index
    %c0_4 = arith.constant 0 : index
    %2 = vector.load %arg3[%c0_3, %c0_4] : memref<8x1xf32, #tpu.memory_space<vmem>>, vector<8x1xf32>
    %3 = tpu.iota {dimensions = array<i32: 0>} : vector<8x128xi32>
    %c3_i32 = arith.constant 3 : i32
    %4 = vector.broadcast %c3_i32 : i32 to vector<8x128xi32>
    %5 = arith.cmpi slt, %3, %4 : vector<8x128xi32>
    %cst = arith.constant -1.000000e+30 : f32
    %6 = vector.broadcast %cst : f32 to vector<8x128xf32>
    %7 = arith.select %5, %0, %6 : vector<8x128xi1>, vector<8x128xf32>
    %cst_5 = arith.constant dense<0xFF800000> : vector<128xf32>
    %8 = vector.multi_reduction <maximumf>, %7, %cst_5 [0] : vector<8x128xf32> to vector<128xf32>
    %9 = vector.shape_cast %8 : vector<128xf32> to vector<1x128xf32>
    %10 = vector.broadcast %9 : vector<1x128xf32> to vector<8x128xf32>
    %11 = arith.subf %7, %10 : vector<8x128xf32>
    %12 = math.exp %11 : vector<8x128xf32>
    %cst_6 = arith.constant 0.000000e+00 : f32
    %13 = vector.broadcast %cst_6 : f32 to vector<8x128xf32>
    %14 = arith.select %5, %12, %13 : vector<8x128xi1>, vector<8x128xf32>
    %cst_7 = arith.constant dense<0.000000e+00> : vector<128xf32>
    %15 = vector.multi_reduction <add>, %14, %cst_7 [0] : vector<8x128xf32> to vector<128xf32>
    %16 = vector.shape_cast %15 : vector<128xf32> to vector<1x128xf32>
    %17 = tpu.reciprocal %16 : vector<1x128xf32> -> vector<1x128xf32>
    %18 = math.log %16 : vector<1x128xf32>
    %19 = vector.broadcast %18 : vector<1x128xf32> to vector<8x128xf32>
    %20 = arith.subf %11, %19 : vector<8x128xf32>
    %21 = vector.broadcast %17 : vector<1x128xf32> to vector<8x128xf32>
    %22 = arith.mulf %14, %21 : vector<8x128xf32>
    %cst_8 = arith.constant 9.99999974E-5 : f32
    %cst_9 = arith.constant 0.999899983 : f32
    %23 = vector.broadcast %cst_8 : f32 to vector<8x128xf32>
    %24 = arith.maximumf %23, %22 : vector<8x128xf32>
    %25 = vector.broadcast %cst_9 : f32 to vector<8x128xf32>
    %26 = arith.minimumf %25, %24 : vector<8x128xf32>
    %cst_10 = arith.constant 0.000000e+00 : f32
    %27 = vector.broadcast %cst_10 : f32 to vector<8x128xf32>
    %28 = arith.select %5, %26, %27 : vector<8x128xi1>, vector<8x128xf32>
    %cst_11 = arith.constant dense<0.000000e+00> : vector<128xf32>
    %29 = vector.multi_reduction <add>, %28, %cst_11 [0] : vector<8x128xf32> to vector<128xf32>
    %30 = vector.shape_cast %29 : vector<128xf32> to vector<1x128xf32>
    %31 = tpu.reciprocal %30 : vector<1x128xf32> -> vector<1x128xf32>
    %32 = vector.broadcast %31 : vector<1x128xf32> to vector<8x128xf32>
    %33 = arith.mulf %28, %32 : vector<8x128xf32>
    %c0_12 = arith.constant 0 : index
    %c0_13 = arith.constant 0 : index
    %34 = vector.load %arg4[%c0_12, %c0_13] : memref<8x128xf32, #tpu.memory_space<vmem>>, vector<8x128xf32>
    tpu.vector_store %arg4[%c0_12, %c0_13], %33 {strides = array<i32>} : memref<8x128xf32, #tpu.memory_space<vmem>>, vector<8x128xf32>,
    %c-100_i32 = arith.constant -100 : i32
    %35 = vector.broadcast %c-100_i32 : i32 to vector<1x128xi32>
    %36 = arith.cmpi ne, %1, %35 : vector<1x128xi32>
    %c0_i32 = arith.constant 0 : i32
    %37 = vector.broadcast %c0_i32 : i32 to vector<1x128xi32>
    %38 = arith.select %36, %1, %37 : vector<1x128xi1>, vector<1x128xi32>
    %39 = vector.broadcast %38 : vector<1x128xi32> to vector<8x128xi32>
    %40 = arith.cmpi eq, %3, %39 : vector<8x128xi32>
    %41 = arith.andi %40, %5 : vector<8x128xi1>
    %cst_14 = arith.constant 0.000000e+00 : f32
    %42 = vector.broadcast %cst_14 : f32 to vector<8x128xf32>
    %43 = arith.select %41, %20, %42 : vector<8x128xi1>, vector<8x128xf32>
    %cst_15 = arith.constant dense<0.000000e+00> : vector<128xf32>
    %44 = vector.multi_reduction <add>, %43, %cst_15 [0] : vector<8x128xf32> to vector<128xf32>
    %45 = vector.shape_cast %44 : vector<128xf32> to vector<1x128xf32>
    %cst_16 = arith.constant 0.000000e+00 : f32
    %46 = vector.broadcast %cst_16 : f32 to vector<1x128xf32>
    %47 = arith.subf %46, %45 : vector<1x128xf32>
    %cst_17 = arith.constant 0.000000e+00 : f32
    %48 = vector.shape_cast %2 : vector<8x1xf32> to vector<8x1xf32>
    %49 = vector.broadcast %48 : vector<8x1xf32> to vector<8x128xf32>
    %50 = vector.broadcast %cst_17 : f32 to vector<8x128xf32>
    %51 = arith.select %41, %49, %50 : vector<8x128xi1>, vector<8x128xf32>
    %cst_18 = arith.constant dense<0.000000e+00> : vector<128xf32>
    %52 = vector.multi_reduction <add>, %51, %cst_18 [0] : vector<8x128xf32> to vector<128xf32>
    %53 = vector.shape_cast %52 : vector<128xf32> to vector<1x128xf32>
    %54 = arith.extui %36 : vector<1x128xi1> to vector<1x128xi32>
    %55 = arith.sitofp %54 : vector<1x128xi32> to vector<1x128xf32>
    %56 = arith.mulf %53, %47 : vector<1x128xf32>
    %57 = arith.mulf %56, %55 : vector<1x128xf32>
    %c0_19 = arith.constant 0 : index
    %c0_20 = arith.constant 0 : index
    %58 = vector.load %arg5[%c0_19, %c0_20] : memref<1x128xf32, #tpu.memory_space<vmem>>, vector<1x128xf32>
    tpu.vector_store %arg5[%c0_19, %c0_20], %57 {strides = array<i32>} : memref<1x128xf32, #tpu.memory_space<vmem>>, vector<1x128xf32>,
    %59 = arith.mulf %53, %55 : vector<1x128xf32>
    %c0_21 = arith.constant 0 : index
    %c0_22 = arith.constant 0 : index
    %60 = vector.load %arg6[%c0_21, %c0_22] : memref<1x128xf32, #tpu.memory_space<vmem>>, vector<1x128xf32>
    tpu.vector_store %arg6[%c0_21, %c0_22], %59 {strides = array<i32>} : memref<1x128xf32, #tpu.memory_space<vmem>>, vector<1x128xf32>,
    return
  }
  func.func @transform_0(%arg0: i32) -> (i32, i32) {
    %c0_i32 = arith.constant 0 : i32
    %c0_i32_0 = arith.constant 0 : i32
    return %c0_i32, %arg0 : i32, i32
  }
  func.func @transform_1(%arg0: i32) -> (i32, i32) {
    %c0_i32 = arith.constant 0 : i32
    %c0_i32_0 = arith.constant 0 : i32
    return %c0_i32, %arg0 : i32, i32
  }
  func.func @transform_2(%arg0: i32) -> (i32, i32) {
    %c0_i32 = arith.constant 0 : i32
    %c0_i32_0 = arith.constant 0 : i32
    %c0_i32_1 = arith.constant 0 : i32
    return %c0_i32, %c0_i32_0 : i32, i32
  }
  func.func @transform_3(%arg0: i32) -> (i32, i32) {
    %c0_i32 = arith.constant 0 : i32
    %c0_i32_0 = arith.constant 0 : i32
    return %c0_i32, %arg0 : i32, i32
  }
  func.func @transform_4(%arg0: i32) -> (i32, i32) {
    %c0_i32 = arith.constant 0 : i32
    %c0_i32_0 = arith.constant 0 : i32
    return %c0_i32, %arg0 : i32, i32
  }
  func.func @transform_5(%arg0: i32) -> (i32, i32) {
    %c0_i32 = arith.constant 0 : i32
    %c0_i32_0 = arith.constant 0 : i32
    return %c0_i32, %arg0 : i32, i32
  }
}

</mosaic_0001>

<llo_original>
// kernel: tpu_custom_call.1
$region0: #{tpu_custom_call.1}
  #allocation0 [shape = 'u32[]', space=smem, size = 0x4, offset = 0x4, fixed_abs, tag = 'smem constant byte address 0x4 - core index']
  #allocation1 [shape = 'u32[144,128]{1,0:T(1,128)}', space=vmem, size = 0x12000, scoped, tag = 'internal scratch']
  %s0 = inlined_call_operand.vmem [shape: f32[8,128], index: 0, kind: input, shape index: {}]
  %s1 = inlined_call_operand.vmem [shape: s32[1,128], index: 1, kind: input, shape index: {}]
  %s2 = inlined_call_operand.vmem [shape: f32[8,1], index: 2, kind: input, shape index: {}]
  %s3 = inlined_call_operand.hbm [shape: f32[8,128], index: 3, kind: output, shape index: {0}]
  %s4 = inlined_call_operand.hbm [shape: f32[1,128], index: 4, kind: output, shape index: {1}]
  %s5 = inlined_call_operand.hbm [shape: f32[1,128], index: 5, kind: output, shape index: {2}]
  %6 = xla_tuple %s3, %s4, %s5
  %s7 = sld [smem:[#allocation0]]
  $region38: #{tpu_custom_call.1} parent=0
    _
  %s9 = ssub.s32 1, %s7
  %s10 = scalar_select 0, %s9, %s7
  $region1: #{tpu_custom_call.1} parent=0
    #allocation2 [shape = 'u8[4096]{0}', space=vmem, size = 0x1000, scoped, tag = 'output window, operand 0, single buffered']
    #allocation3 [shape = 's32[1]{0}', space=sflag, size = 0x4, scoped, tag = 'scoped memory for tpu_custom_call.1']
    #allocation4 [shape = 'u8[512]{0}', space=vmem, size = 0x400, scoped, tag = 'output window, operand 1, single buffered']
    #allocation5 [shape = 's32[1]{0}', space=sflag, size = 0x4, scoped, tag = 'scoped memory for tpu_custom_call.1']
    #allocation6 [shape = 'u8[512]{0}', space=vmem, size = 0x400, scoped, tag = 'output window, operand 2, single buffered']
    %11 = vsyncpa [#allocation3], 0
    %12 = vsyncpa [#allocation5], 0
    // Predicated region
    $region2: #{tpu_custom_call.1} parent=1 // pred_check
      _
    $region3: #{tpu_custom_call.1} parent=1 // pred_check_branch
      %14 = sbr.rel (0) target = $region5
    $region4: #{tpu_custom_call.1} parent=1 // pred_region
      _
    $region5: #{tpu_custom_call.1} parent=1 // pred_fallthru
      _
    // Predicated region
    $region6: #{tpu_custom_call.1} parent=1 // pred_check
      _
    $region7: #{tpu_custom_call.1} parent=1 // pred_check_branch
      %16 = sbr.rel (0) target = $region9
    $region8: #{tpu_custom_call.1} parent=1 // pred_region
      _
    $region9: #{tpu_custom_call.1} parent=1 // pred_fallthru
      _
    // Predicated region
    $region10: #{tpu_custom_call.1} parent=1 // pred_check
      _
    $region11: #{tpu_custom_call.1} parent=1 // pred_check_branch
      %18 = sbr.rel (0) target = $region13
    $region12: #{tpu_custom_call.1} parent=1 // pred_region
      _
    $region13: #{tpu_custom_call.1} parent=1 // pred_fallthru
      _
    %v19 = vld [vmem:[%s0] sm:$0xff]
    %v20 = vld [vmem:[%s1] sm:$0x1]
    %v21 = vld [vmem:[%s2] sm:$0xff]
    %v22 = vlaneseq
    %v23 = vshrl.u32 %v22, 7
    %vm24 = vcmp.lt.s32.totalorder %v23, 3
    %v25 = vsel %vm24, %v19, -1e+30
    %v26 = vrot.slane %v25, 4
    %v27 = vmax.f32 %v25, %v26
    %v28 = vrot.slane %v27, 2
    %v29 = vmax.f32 %v27, %v28
    %v30 = vrot.slane %v29, 1
    %v31 = vmax.f32 %v29, %v30
    %v32 = vsub.f32 %v25, %v31
    %v33 = vmul.f32 %v32, 1.442695
    %v34 = vpow.pop %v33
    %v35 = vsel %vm24, %v34, 0.0
    %v36 = vrot.slane %v35, 4
    %v37 = vadd.f32 %v35, %v36
    %v38 = vrot.slane %v37, 2
    %v39 = vadd.f32 %v37, %v38
    %v40 = vrot.slane %v39, 1
    %v41 = vadd.f32 %v39, %v40
    %v42 = vrcp.pop %v41
    %v43 = vlog2.pop %v41
    %v44 = vmul.f32 %v43, 0.6931472
    %v45 = vsub.f32 %v32, %v44
    %v46 = vmul.f32 %v35, %v42
    %v47 = vmax.f32 %v46, 0.0001
    %v48 = vmin.f32 %v47, 0.9999
    %v49 = vsel %vm24, %v48, 0.0
    %v50 = vrot.slane %v49, 4
    %v51 = vadd.f32 %v49, %v50
    %v52 = vrot.slane %v51, 2
    %v53 = vadd.f32 %v51, %v52
    %v54 = vrot.slane %v53, 1
    %v55 = vadd.f32 %v53, %v54
    %v56 = vrcp.pop %v55
    %v57 = vmul.f32 %v49, %v56
    %58 = vst [vmem:[#allocation2] sm:$0xff] %v57
    %vm59 = vcmp.ne.s32.totalorder %v20, 4294967196
    %v60 = vsel %vm59, %v20, 0
    %v61 = vlaneseq
    %v62 = vshrl.u32 %v61, 7
    %v63 = vsub.s32 0, %v62
    %v64 = vrot.slane %v60, %v63
    %vm65 = vcmp.eq.s32.totalorder %v23, %v64
    %vm66 = vmand %vm65, %vm24
    %v67 = vsel %vm66, %v45, 0.0
    %v68 = vrot.slane %v67, 4
    %v69 = vadd.f32 %v67, %v68
    %v70 = vrot.slane %v69, 2
    %v71 = vadd.f32 %v69, %v70
    %v72 = vrot.slane %v71, 1
    %v73 = vadd.f32 %v71, %v72
    %v74 = vsub.f32 0.0, %v73
    %76 = vset.pattern.permute.xlu0 0
    %77 = vperm.xlu0 %76, %v21
    %v78 = vpop.permute.xlu0 %77
    %v80 = vsel %vm66, %v78, 0.0
    %v81 = vrot.slane %v80, 4
    %v82 = vadd.f32 %v80, %v81
    %v83 = vrot.slane %v82, 2
    %v84 = vadd.f32 %v82, %v83
    %v85 = vrot.slane %v84, 1
    %v86 = vadd.f32 %v84, %v85
    %v87 = vsel %vm59, 1, 0
    %v88 = vcvt.s32.f32 %v87
    %v89 = vmul.f32 %v86, %v74
    %v90 = vmul.f32 %v89, %v88
    %91 = vst [vmem:[#allocation4] sm:$0x1] %v90
    %v92 = vmul.f32 %v86, %v88
    %93 = vst [vmem:[#allocation6] sm:$0x1] %v92
    // Predicated region
    $region14: #{tpu_custom_call.1} parent=1 // pred_check
      _
    $region15: #{tpu_custom_call.1} parent=1 // pred_check_branch
      %95 = sbr.rel (0) target = $region17
    $region16: #{tpu_custom_call.1} parent=1 // pred_region
      %s97 = ssub.s32 128, 128
      %98 = vsyncadd [#allocation3], %s97
      %s100 = sshll.u32 [#allocation2], 4
      %s101 = int_to_ptr.vmem [resolvable:$true] %s100
      %103 = dma.vmem_to_hbm [thread:$0]  %s101, 128, %s3, [#allocation3]
    $region17: #{tpu_custom_call.1} parent=1 // pred_fallthru
      _
    // Predicated region
    $region18: #{tpu_custom_call.1} parent=1 // pred_check
      _
    $region19: #{tpu_custom_call.1} parent=1 // pred_check_branch
      %105 = sbr.rel (0) target = $region21
    $region20: #{tpu_custom_call.1} parent=1 // pred_region
      %s107 = ssub.s32 16, 16
      %108 = vsyncadd [#allocation5], %s107
      %s110 = sshll.u32 [#allocation4], 4
      %s111 = int_to_ptr.vmem [resolvable:$true] %s110
      %113 = dma.vmem_to_hbm [thread:$0]  %s111, 16, %s4, [#allocation5]
    $region21: #{tpu_custom_call.1} parent=1 // pred_fallthru
      _
    // Predicated region
    $region22: #{tpu_custom_call.1} parent=1 // pred_check
      _
    $region23: #{tpu_custom_call.1} parent=1 // pred_check_branch
      %115 = sbr.rel (0) target = $region25
    $region24: #{tpu_custom_call.1} parent=1 // pred_region
      %s117 = ssub.s32 16, 16
      %118 = vsyncadd [#allocation5], %s117
      %s120 = sshll.u32 [#allocation6], 4
      %s121 = int_to_ptr.vmem [resolvable:$true] %s120
      %123 = dma.vmem_to_hbm [thread:$0]  %s121, 16, %s5, [#allocation5]
    $region25: #{tpu_custom_call.1} parent=1 // pred_fallthru
      _
    // Predicated region
    $region26: #{tpu_custom_call.1} parent=1 // pred_check
      _
    $region27: #{tpu_custom_call.1} parent=1 // pred_check_branch
      %125 = sbr.rel (0) target = $region29
    $region28: #{tpu_custom_call.1} parent=1 // pred_region
      %126 = dma.done [#allocation3], 128
    $region29: #{tpu_custom_call.1} parent=1 // pred_fallthru
      _
    // Predicated region
    $region30: #{tpu_custom_call.1} parent=1 // pred_check
      _
    $region31: #{tpu_custom_call.1} parent=1 // pred_check_branch
      %128 = sbr.rel (0) target = $region33
    $region32: #{tpu_custom_call.1} parent=1 // pred_region
      %129 = dma.done [#allocation5], 16
    $region33: #{tpu_custom_call.1} parent=1 // pred_fallthru
      _
    // Predicated region
    $region34: #{tpu_custom_call.1} parent=1 // pred_check
      _
    $region35: #{tpu_custom_call.1} parent=1 // pred_check_branch
      %131 = sbr.rel (0) target = $region37
    $region36: #{tpu_custom_call.1} parent=1 // pred_region
      %132 = dma.done [#allocation5], 16
    $region37: #{tpu_custom_call.1} parent=1 // pred_fallthru
      _
    %133 = vsyncpa [#allocation3], 1
    %134 = vsyncpa [#allocation5], 1

</llo_original>
